<compile_context>
chip_gen: v7x
topology: tpu7x:2x2x1
jax: 0.10.0
libtpu: 0.0.40
codegen_flags: <defaults>
</compile_context>

<pallas_src>
import math

import jax
import jax.numpy as jnp
from jax.experimental import pallas as pl
from jax.experimental.pallas import tpu as pltpu


def _make_dice_sums_kernel(C, tile_n, S, tiles_per_p, covered_cols):
    needs_mask = covered_cols > S  # statically: can any tile overrun S?

    def lane_fold(x):
        # [C, w] -> [C, 128]: tree-fold vreg-aligned lane halves (pure VPU adds,
        # O(log) traced ops), then linear-fold any non-halvable remainder.
        w = x.shape[1]
        while w > 128 and (w // 2) % 128 == 0:
            h = w // 2
            x = x[:, :h] + x[:, h:w]
            w = h
        acc = x[:, 0:128]
        for j in range(1, w // 128):
            acc = acc + x[:, j * 128:(j + 1) * 128]
        return acc

    def kernel(pred_ref, targ_ref, acc_ref):
        i = pl.program_id(2)

        @pl.when(i == 0)
        def _():
            acc_ref[...] = jnp.zeros_like(acc_ref)

        logits = pred_ref[0].astype(jnp.float32)   # [C, tile_n] (bf16 upcast here)
        targ = targ_ref[0].astype(jnp.int32)       # [1, tile_n] (int8 labels upcast here)
        cls = jax.lax.broadcasted_iota(jnp.int32, (C, 1), 0)   # [C, 1]

        def accumulate(lg, tg, pmask):
            # softmax over the channel (sublane) axis
            m = jnp.max(lg, axis=0, keepdims=True)
            e = jnp.exp(lg - m)
            denom = jnp.sum(e, axis=0, keepdims=True)
            probs = e * pl.reciprocal(denom, approx=True)   # EUP slot, ~free vs VALU
            onehot = (tg == cls).astype(jnp.float32)        # [C, tile_n]
            if pmask is not None:
                probs = jnp.where(pmask, probs, 0.0)        # pred-sum ignores OOB lanes
            acc_ref[0, 0] += lane_fold(probs * onehot)      # intersection
            acc_ref[0, 1] += lane_fold(probs)               # pred sum
            acc_ref[0, 2] += lane_fold(onehot)              # target sum

        if needs_mask:
            tile_start = (pl.program_id(1) * tiles_per_p + i) * tile_n
            boundary = tile_start + tile_n > S

            @pl.when(boundary)   # ragged / fully-OOB tile: sanitize before exp
            def _():
                col = jax.lax.broadcasted_iota(jnp.int32, (1, tile_n), 1) + tile_start
                valid = col < S
                accumulate(jnp.where(valid, logits, 0.0),
                           jnp.where(valid, targ, -1),   # -1 never matches a class
                           valid)

            @pl.when(jnp.logical_not(boundary))   # fast path: no masking work
            def _():
                accumulate(logits, targ, None)
        else:
            accumulate(logits, targ, None)

    return kernel


def dice_loss(pred, target, *, tile_n=None, num_partitions=None):
    """pred: [B, C, *spatial] logits (f32 or bf16); target: [B, *spatial] int labels."""
    B, C = int(pred.shape[0]), int(pred.shape[1])
    spatial = pred.shape[2:]
    S = math.prod(int(s) for s in spatial)

    pred3 = pred.reshape(B, C, S)                 # free: NCHW-like is contiguous
    if target.dtype in (jnp.int8, jnp.uint8, jnp.int32):
        targ3 = target.reshape(B, 1, S)           # keep narrow labels narrow in HBM
    else:
        targ3 = target.reshape(B, 1, S).astype(jnp.int32)

    # Generation-aware VMEM budget (v5e/v6e: 128 MiB, v7x: 64 MiB physical).
    try:
        vmem_cap = int(pltpu.get_tpu_info().vmem_capacity_bytes)
    except Exception:
        vmem_cap = 64 * 1024 * 1024               # conservative (v7x) fallback
    pred_b = pred3.dtype.itemsize
    targ_b = targ3.dtype.itemsize
    # double-buffered input tiles + ~6 live [C, tile_n] f32 intermediates per step
    per_lane = 2 * (C * pred_b + targ_b) + 6 * C * 4
    budget = min((vmem_cap * 2) // 5, 48 * 1024 * 1024)   # ~25 MiB on v7x, 48 MiB v5e/v6e

    if tile_n is None:
        tile_n = budget // per_lane
    tile_n = max(128, min(65536, (tile_n // 128) * 128))
    tile_n = min(tile_n, pl.cdiv(S, 128) * 128)   # don't over-tile tiny inputs

    num_tiles = pl.cdiv(S, tile_n)
    if num_partitions is None:
        num_partitions = 2 if num_tiles >= 2 else 1
    P = max(1, min(int(num_partitions), num_tiles))
    tiles_per_p = pl.cdiv(num_tiles, P)
    covered_cols = P * tiles_per_p * tile_n

    if P * tiles_per_p == num_tiles:
        def sp_idx(p, i):                         # exact cover: plain arithmetic
            return p * tiles_per_p + i
    else:
        def sp_idx(p, i):                         # clamp padding tiles onto the last
            return jnp.minimum(p * tiles_per_p + i, num_tiles - 1)

    need = per_lane * tile_n + (1 << 20)
    vmem_limit = max(32 * 1024 * 1024,
                     min((vmem_cap * 9) // 10, need + 8 * 1024 * 1024))

    acc = pl.pallas_call(
        _make_dice_sums_kernel(C, tile_n, S, tiles_per_p, covered_cols),
        out_shape=jax.ShapeDtypeStruct((B * P, 3, C, 128), jnp.float32),
        grid=(B, P, tiles_per_p),
        in_specs=[
            pl.BlockSpec((1, C, tile_n), lambda b, p, i: (b, 0, sp_idx(p, i))),
            pl.BlockSpec((1, 1, tile_n), lambda b, p, i: (b, 0, sp_idx(p, i))),
        ],
        # one fused accumulator slab per (batch, partition) -> both outer axes
        # may run in parallel (uses both v7x TensorCores) without races.
        out_specs=pl.BlockSpec((1, 3, C, 128), lambda b, p, i: (b * P + p, 0, 0, 0)),
        compiler_params=pltpu.CompilerParams(
            dimension_semantics=("parallel", "parallel", "arbitrary"),
            vmem_limit_bytes=int(vmem_limit)),
    )(pred3, targ3)

    # glue: reduce slabs + lanes, classes 1..C-1, per-class dice, 1 - mean (PyTorch ref)
    sums = jnp.sum(acc, axis=(0, 3))              # (3, C)
    inter, psum, tsum = sums[0, 1:], sums[1, 1:], sums[2, 1:]
    dice = 2.0 * inter / (psum + tsum + 1e-07)
    return 1.0 - jnp.mean(dice)


def _dice_loss_ref(pred, target):
    p = jax.nn.softmax(pred.astype(jnp.float32), axis=1)
    scores = []
    for c in range(1, pred.shape[1]):
        pc = p[:, c, ...]
        tc = (target == c).astype(jnp.float32)
        scores.append(2.0 * jnp.sum(pc * tc) / (jnp.sum(pc) + jnp.sum(tc) + 1e-07))
    return 1.0 - jnp.mean(jnp.stack(scores))


if __name__ == "__main__":
    key = jax.random.PRNGKey(0)
    k1, k2, k3, k4, k5, k6 = jax.random.split(key, 6)

    # Tolerance: the kernel uses the EUP approximate reciprocal for the softmax
    # denominator, so allow a slightly looser (still loss-scale-negligible) bound.
    TOL = 2e-3

    # 1) small NCHW logits + int32 labels
    B, C, H, W = 2, 4, 16, 16
    pred = jax.random.normal(k1, (B, C, H, W), dtype=jnp.float32)
    target = jax.random.randint(k2, (B, H, W), 0, C, dtype=jnp.int32)
    loss = jax.block_until_ready(dice_loss(pred, target))
    ref = _dice_loss_ref(pred, target)
    assert jnp.allclose(loss, ref, atol=TOL, rtol=TOL), (loss, ref)

    # 2) ragged 3-D spatial + int8 labels (narrow-label HBM path + tail mask)
    pred3d = jax.random.normal(k3, (1, 4, 7, 6, 5), dtype=jnp.float32)
    target3d = jax.random.randint(k4, (1, 7, 6, 5), 0, 4, dtype=jnp.int8)
    loss2 = jax.block_until_ready(dice_loss(pred3d, target3d))
    ref2 = _dice_loss_ref(pred3d, target3d.astype(jnp.int32))
    assert jnp.allclose(loss2, ref2, atol=TOL, rtol=TOL), (loss2, ref2)

    # 3) bf16 logits, multiple tiles + two parallel partitions (exercises the
    #    fast/masked branch gating and the clamped padding tile)
    pred3 = jax.random.normal(k5, (1, 4, 48, 48, 48), dtype=jnp.bfloat16)
    target3 = jax.random.randint(k6, (1, 48, 48, 48), 0, 4, dtype=jnp.int32)
    loss3 = jax.block_until_ready(dice_loss(pred3, target3, tile_n=16384))
    ref3 = _dice_loss_ref(pred3, target3)
    assert jnp.allclose(loss3, ref3, atol=TOL, rtol=TOL), (loss3, ref3)

    print("KERNEL_OK")
</pallas_src>

<mosaic_0001>
module attributes {stable_mosaic.version = 11 : i64} {
  func.func @kernel(%arg0: i32, %arg1: i32, %arg2: i32, %arg3: memref<1x4x256xf32, #tpu.memory_space<vmem>>, %arg4: memref<1x1x256xi32, #tpu.memory_space<vmem>>, %arg5: memref<1x3x4x128xf32, #tpu.memory_space<vmem>>) attributes {dimension_semantics = [#tpu.dimension_semantics<parallel>, #tpu.dimension_semantics<parallel>, #tpu.dimension_semantics<arbitrary>], iteration_bounds = array<i64: 2, 1, 1>, scalar_prefetch = 0 : i64, scratch_operands = 0 : i64, tpu.core_type = #tpu.core_type<tc>, window_params = [{transform_indices = @transform_0, window_bounds = array<i64: 1, 4, 256>}, {transform_indices = @transform_1, window_bounds = array<i64: 1, 1, 256>}, {transform_indices = @transform_2, window_bounds = array<i64: 1, 3, 4, 128>}]} {
    %c0_i32 = arith.constant 0 : i32
    %0 = arith.cmpi eq, %arg2, %c0_i32 : i32
    %1 = arith.extui %0 : i1 to i32
    %c0_i32_0 = arith.constant 0 : i32
    %2 = arith.cmpi ne, %1, %c0_i32_0 : i32
    scf.if %2 {
      %cst_29 = arith.constant 0.000000e+00 : f32
      %51 = vector.broadcast %cst_29 : f32 to vector<1x3x4x128xf32>
      %c0_30 = arith.constant 0 : index
      %c0_31 = arith.constant 0 : index
      %c0_32 = arith.constant 0 : index
      %c0_33 = arith.constant 0 : index
      %52 = vector.load %arg5[%c0_30, %c0_31, %c0_32, %c0_33] : memref<1x3x4x128xf32, #tpu.memory_space<vmem>>, vector<1x3x4x128xf32>
      tpu.vector_store %arg5[%c0_30, %c0_31, %c0_32, %c0_33], %51 {strides = array<i32>} : memref<1x3x4x128xf32, #tpu.memory_space<vmem>>, vector<1x3x4x128xf32>,
    } else {
    }
    %c0 = arith.constant 0 : index
    %c0_1 = arith.constant 0 : index
    %c0_2 = arith.constant 0 : index
    %3 = vector.load %arg3[%c0, %c0_1, %c0_2] : memref<1x4x256xf32, #tpu.memory_space<vmem>>, vector<1x4x256xf32>
    %4 = vector.shape_cast %3 : vector<1x4x256xf32> to vector<4x256xf32>
    %c0_3 = arith.constant 0 : index
    %c0_4 = arith.constant 0 : index
    %c0_5 = arith.constant 0 : index
    %5 = vector.load %arg4[%c0_3, %c0_4, %c0_5] : memref<1x1x256xi32, #tpu.memory_space<vmem>>, vector<1x1x256xi32>
    %6 = vector.shape_cast %5 : vector<1x1x256xi32> to vector<1x256xi32>
    %7 = tpu.iota {dimensions = array<i32: 0>} : vector<4x1xi32>
    %cst = arith.constant dense<0xFF800000> : vector<256xf32>
    %8 = vector.multi_reduction <maximumf>, %4, %cst [0] : vector<4x256xf32> to vector<256xf32>
    %9 = vector.shape_cast %8 : vector<256xf32> to vector<1x256xf32>
    %10 = vector.broadcast %9 : vector<1x256xf32> to vector<4x256xf32>
    %11 = arith.subf %4, %10 : vector<4x256xf32>
    %12 = math.exp %11 : vector<4x256xf32>
    %cst_6 = arith.constant dense<0.000000e+00> : vector<256xf32>
    %13 = vector.multi_reduction <add>, %12, %cst_6 [0] : vector<4x256xf32> to vector<256xf32>
    %14 = vector.shape_cast %13 : vector<256xf32> to vector<1x256xf32>
    %15 = tpu.reciprocal %14 {approx = true} : vector<1x256xf32> -> vector<1x256xf32>
    %16 = vector.broadcast %15 : vector<1x256xf32> to vector<4x256xf32>
    %17 = arith.mulf %12, %16 : vector<4x256xf32>
    %18 = vector.broadcast %6 : vector<1x256xi32> to vector<4x256xi32>
    %19 = vector.broadcast %7 : vector<4x1xi32> to vector<4x256xi32>
    %20 = arith.cmpi eq, %18, %19 : vector<4x256xi32>
    %21 = arith.extui %20 : vector<4x256xi1> to vector<4x256xi32>
    %22 = arith.sitofp %21 : vector<4x256xi32> to vector<4x256xf32>
    %c0_7 = arith.constant 0 : index
    %c0_8 = arith.constant 0 : index
    %c0_9 = arith.constant 0 : index
    %c0_10 = arith.constant 0 : index
    %23 = vector.load %arg5[%c0_7, %c0_8, %c0_9, %c0_10] : memref<1x3x4x128xf32, #tpu.memory_space<vmem>>, vector<1x1x4x128xf32>
    %24 = vector.shape_cast %23 : vector<1x1x4x128xf32> to vector<4x128xf32>
    %25 = arith.mulf %17, %22 : vector<4x256xf32>
    %26 = vector.extract_strided_slice %25 {offsets = [0, 0], sizes = [4, 128], strides = [1, 1]} : vector<4x256xf32> to vector<4x128xf32>
    %27 = vector.extract_strided_slice %25 {offsets = [0, 128], sizes = [4, 128], strides = [1, 1]} : vector<4x256xf32> to vector<4x128xf32>
    %28 = arith.addf %26, %27 : vector<4x128xf32>
    %29 = arith.addf %24, %28 : vector<4x128xf32>
    %c0_11 = arith.constant 0 : index
    %c0_12 = arith.constant 0 : index
    %c0_13 = arith.constant 0 : index
    %c0_14 = arith.constant 0 : index
    %30 = vector.load %arg5[%c0_11, %c0_12, %c0_13, %c0_14] : memref<1x3x4x128xf32, #tpu.memory_space<vmem>>, vector<1x1x4x128xf32>
    %31 = vector.shape_cast %30 : vector<1x1x4x128xf32> to vector<4x128xf32>
    %32 = vector.shape_cast %29 : vector<4x128xf32> to vector<1x1x4x128xf32>
    tpu.vector_store %arg5[%c0_11, %c0_12, %c0_13, %c0_14], %32 {strides = array<i32>} : memref<1x3x4x128xf32, #tpu.memory_space<vmem>>, vector<1x1x4x128xf32>,
    %c0_15 = arith.constant 0 : index
    %c1 = arith.constant 1 : index
    %c0_16 = arith.constant 0 : index
    %c0_17 = arith.constant 0 : index
    %33 = vector.load %arg5[%c0_15, %c1, %c0_16, %c0_17] : memref<1x3x4x128xf32, #tpu.memory_space<vmem>>, vector<1x1x4x128xf32>
    %34 = vector.shape_cast %33 : vector<1x1x4x128xf32> to vector<4x128xf32>
    %35 = vector.extract_strided_slice %17 {offsets = [0, 0], sizes = [4, 128], strides = [1, 1]} : vector<4x256xf32> to vector<4x128xf32>
    %36 = vector.extract_strided_slice %17 {offsets = [0, 128], sizes = [4, 128], strides = [1, 1]} : vector<4x256xf32> to vector<4x128xf32>
    %37 = arith.addf %35, %36 : vector<4x128xf32>
    %38 = arith.addf %34, %37 : vector<4x128xf32>
    %c0_18 = arith.constant 0 : index
    %c1_19 = arith.constant 1 : index
    %c0_20 = arith.constant 0 : index
    %c0_21 = arith.constant 0 : index
    %39 = vector.load %arg5[%c0_18, %c1_19, %c0_20, %c0_21] : memref<1x3x4x128xf32, #tpu.memory_space<vmem>>, vector<1x1x4x128xf32>
    %40 = vector.shape_cast %39 : vector<1x1x4x128xf32> to vector<4x128xf32>
    %41 = vector.shape_cast %38 : vector<4x128xf32> to vector<1x1x4x128xf32>
    tpu.vector_store %arg5[%c0_18, %c1_19, %c0_20, %c0_21], %41 {strides = array<i32>} : memref<1x3x4x128xf32, #tpu.memory_space<vmem>>, vector<1x1x4x128xf32>,
    %c0_22 = arith.constant 0 : index
    %c2 = arith.constant 2 : index
    %c0_23 = arith.constant 0 : index
    %c0_24 = arith.constant 0 : index
    %42 = vector.load %arg5[%c0_22, %c2, %c0_23, %c0_24] : memref<1x3x4x128xf32, #tpu.memory_space<vmem>>, vector<1x1x4x128xf32>
    %43 = vector.shape_cast %42 : vector<1x1x4x128xf32> to vector<4x128xf32>
    %44 = vector.extract_strided_slice %22 {offsets = [0, 0], sizes = [4, 128], strides = [1, 1]} : vector<4x256xf32> to vector<4x128xf32>
    %45 = vector.extract_strided_slice %22 {offsets = [0, 128], sizes = [4, 128], strides = [1, 1]} : vector<4x256xf32> to vector<4x128xf32>
    %46 = arith.addf %44, %45 : vector<4x128xf32>
    %47 = arith.addf %43, %46 : vector<4x128xf32>
    %c0_25 = arith.constant 0 : index
    %c2_26 = arith.constant 2 : index
    %c0_27 = arith.constant 0 : index
    %c0_28 = arith.constant 0 : index
    %48 = vector.load %arg5[%c0_25, %c2_26, %c0_27, %c0_28] : memref<1x3x4x128xf32, #tpu.memory_space<vmem>>, vector<1x1x4x128xf32>
    %49 = vector.shape_cast %48 : vector<1x1x4x128xf32> to vector<4x128xf32>
    %50 = vector.shape_cast %47 : vector<4x128xf32> to vector<1x1x4x128xf32>
    tpu.vector_store %arg5[%c0_25, %c2_26, %c0_27, %c0_28], %50 {strides = array<i32>} : memref<1x3x4x128xf32, #tpu.memory_space<vmem>>, vector<1x1x4x128xf32>,
    return
  }
  func.func @transform_0(%arg0: i32, %arg1: i32, %arg2: i32) -> (i32, i32, i32) {
    %c1_i32 = arith.constant 1 : i32
    %0 = arith.muli %arg1, %c1_i32 : i32
    %1 = arith.addi %0, %arg2 : i32
    %c0_i32 = arith.constant 0 : i32
    %c0_i32_0 = arith.constant 0 : i32
    return %arg0, %c0_i32, %1 : i32, i32, i32
  }
  func.func @transform_1(%arg0: i32, %arg1: i32, %arg2: i32) -> (i32, i32, i32) {
    %c1_i32 = arith.constant 1 : i32
    %0 = arith.muli %arg1, %c1_i32 : i32
    %1 = arith.addi %0, %arg2 : i32
    %c0_i32 = arith.constant 0 : i32
    %c0_i32_0 = arith.constant 0 : i32
    return %arg0, %c0_i32, %1 : i32, i32, i32
  }
  func.func @transform_2(%arg0: i32, %arg1: i32, %arg2: i32) -> (i32, i32, i32, i32) {
    %c1_i32 = arith.constant 1 : i32
    %0 = arith.muli %arg0, %c1_i32 : i32
    %1 = arith.addi %0, %arg1 : i32
    %c0_i32 = arith.constant 0 : i32
    %c0_i32_0 = arith.constant 0 : i32
    %c0_i32_1 = arith.constant 0 : i32
    %c0_i32_2 = arith.constant 0 : i32
    return %1, %c0_i32, %c0_i32_0, %c0_i32_1 : i32, i32, i32, i32
  }
}

</mosaic_0001>

<llo_original>
// kernel: tpu_custom_call.1
$region0: #{tpu_custom_call.1}
  #allocation0 [shape = 'u32[]', space=smem, size = 0x4, offset = 0x4, fixed_abs, tag = 'smem constant byte address 0x4 - core index']
  #allocation1 [shape = 'u32[144,128]{1,0:T(1,128)}', space=vmem, size = 0x12000, scoped, tag = 'internal scratch']
  %s0 = inlined_call_operand.hbm [shape: f32[2,4,256], index: 0, kind: input, shape index: {}]
  %s1 = inlined_call_operand.hbm [shape: s32[2,1,256], index: 1, kind: input, shape index: {}]
  %s2 = inlined_call_operand.hbm [shape: f32[2,3,4,128], index: 2, kind: output, shape index: {}]
  %s3 = sld [smem:[#allocation0]]
  $region53: #{tpu_custom_call.1} parent=0
    _
  %s5 = ssub.s32 1, %s3
  %s6 = scalar_select 0, %s5, %s3
  $region1: #{tpu_custom_call.1} parent=0
    #allocation2 [shape = 'u8[8192]{0}', space=vmem, size = 0x2000, scoped, tag = 'input window, operand 0']
    #allocation3 [shape = 's32[2]{0}', space=sflag, size = 0x8, scoped, tag = 'scoped memory for tpu_custom_call.1']
    #allocation4 [shape = 's32[2]{0}', space=sflag, size = 0x8, scoped, tag = 'scoped memory for tpu_custom_call.1']
    #allocation5 [shape = 'u8[2048]{0}', space=vmem, size = 0x800, scoped, tag = 'input window, operand 1']
    #allocation6 [shape = 's32[2]{0}', space=sflag, size = 0x8, scoped, tag = 'scoped memory for tpu_custom_call.1']
    #allocation7 [shape = 'u8[12288]{0}', space=vmem, size = 0x3000, scoped, tag = 'output window, operand 0']
    %7 = vsyncpa [#allocation3], 0
    %s8 = scalar_lea.sflag [#allocation3], 1
    %9 = vsyncpa %s8, 0
    %10 = vsyncpa [#allocation6], 0
    %s11 = scalar_lea.sflag [#allocation6], 1
    %12 = vsyncpa %s11, 0
    %13 = vsyncpa [#allocation4], 0
    %s14 = scalar_lea.sflag [#allocation4], 1
    %15 = vsyncpa %s14, 0
    loop: start=0, step=1, limit=4
    $region2: #{tpu_custom_call.1} parent=1 // loop_pre_header
      _
    $region3: #{tpu_custom_call.1} parent=1 // loop_header
      %s17 = sphi 0, %s21
      %p18 = scmp.ge.s32.totalorder %s17, 4
      %s24 = sphi 0, %s43
      %s25 = sphi 0, %s39
      %s26 = sphi 0, %s35
      %s27 = sphi 0, %s24
      %s28 = sphi 0, %s25
      %s29 = sphi 0, %s26
      %s30 = sphi 0, %s27
      %s31 = sphi 0, %s28
      %s32 = sphi 0, %s29
      %s50 = sphi 0, %s52
      %s53 = sphi 0, %s50
      %s54 = sphi 0, %s53
      %s70 = sphi 0, %s54
      %s80 = sphi 0, %s82
      %s83 = sphi 0, %s80
      %s84 = sphi 0, %s83
      %s100 = sphi 0, %s84
      %s108 = sphi 0, %s110
      %s111 = sphi 0, %s108
      %s112 = sphi 0, %s111
      %s128 = sphi 0, %s112
    $region4: #{tpu_custom_call.1} parent=1 // loop_header_branch
      %20 = sbr.rel (%p18) target = $region8
    $region5: #{tpu_custom_call.1} parent=1 // loop_body
      %s22 = ssub.s32 %s17, 1
      %s23 = ssub.s32 %s17, 2
      %s33 = sadd.s32 1, %s26
      %p34 = scmp.ge.s32.totalorder %s33, 1
      %s35 = scalar_select %p34, 0, %s33
      %s36 = sadd.s32 1, %s25
      %s37 = scalar_select %p34, %s36, %s25
      %p38 = scmp.ge.s32.totalorder %s37, 1
      %s39 = scalar_select %p38, 0, %s37
      %s40 = sadd.s32 1, %s24
      %s41 = scalar_select %p38, %s40, %s24
      %p42 = scmp.ge.s32.totalorder %s41, 2
      %s43 = scalar_select %p42, 0, %s41
      %s44 = sadd.s32 %s25, %s26
      %s45 = sadd.s32 %s39, %s35
      %s46 = ssub.s32 %s24, %s43
      %s47 = ssub.s32 %s44, %s45
      %s48 = sor.u32 %s46, %s47
      %p49 = scmp.eq.s32.totalorder %s48, 0
      %s51 = sadd.s32 %s50, 1
      %s52 = scalar_select %p49, %s50, %s51
      %p55 = pneg %p49
      %p56 = scmp.eq.s32.totalorder %s17, 1
      %p57 = por %p55, %p56
      %p58 = scmp.ne.s32.totalorder %s50, %s53
      %p59 = scmp.eq.s32.totalorder %s17, 0
      %p60 = por %p58, %p59
      %p61 = scmp.ne.s32.totalorder %s50, %s53
      %p62 = scmp.eq.s32.totalorder %s22, 1
      %p63 = por %p61, %p62
      %p64 = scmp.ne.s32.totalorder %s53, %s54
      %p65 = scmp.eq.s32.totalorder %s22, 0
      %p66 = por %p64, %p65
      %p67 = scmp.ne.s32.totalorder %s53, %s54
      %p68 = scmp.eq.s32.totalorder %s23, 1
      %p69 = por %p67, %p68
      %p71 = scmp.ne.s32.totalorder %s54, %s70
      %p72 = scmp.eq.s32.totalorder %s23, 0
      %p73 = por %p71, %p72
      %s74 = sadd.s32 %s25, %s26
      %s75 = sadd.s32 %s39, %s35
      %s76 = ssub.s32 %s24, %s43
      %s77 = ssub.s32 %s74, %s75
      %s78 = sor.u32 %s76, %s77
      %p79 = scmp.eq.s32.totalorder %s78, 0
      %s81 = sadd.s32 %s80, 1
      %s82 = scalar_select %p79, %s80, %s81
      %p85 = pneg %p79
      %p86 = scmp.eq.s32.totalorder %s17, 1
      %p87 = por %p85, %p86
      %p88 = scmp.ne.s32.totalorder %s80, %s83
      %p89 = scmp.eq.s32.totalorder %s17, 0
      %p90 = por %p88, %p89
      %p91 = scmp.ne.s32.totalorder %s80, %s83
      %p92 = scmp.eq.s32.totalorder %s22, 1
      %p93 = por %p91, %p92
      %p94 = scmp.ne.s32.totalorder %s83, %s84
      %p95 = scmp.eq.s32.totalorder %s22, 0
      %p96 = por %p94, %p95
      %p97 = scmp.ne.s32.totalorder %s83, %s84
      %p98 = scmp.eq.s32.totalorder %s23, 1
      %p99 = por %p97, %p98
      %p101 = scmp.ne.s32.totalorder %s84, %s100
      %p102 = scmp.eq.s32.totalorder %s23, 0
      %p103 = por %p101, %p102
      %s104 = sadd.s32 %s24, %s25
      %s105 = sadd.s32 %s43, %s39
      %s106 = ssub.s32 %s104, %s105
      %p107 = scmp.eq.s32.totalorder %s106, 0
      %s109 = sadd.s32 %s108, 1
      %s110 = scalar_select %p107, %s108, %s109
      %p113 = pneg %p107
      %p114 = scmp.eq.s32.totalorder %s17, 1
      %p115 = por %p113, %p114
      %p116 = scmp.ne.s32.totalorder %s108, %s111
      %p117 = scmp.eq.s32.totalorder %s17, 0
      %p118 = por %p116, %p117
      %p119 = scmp.ne.s32.totalorder %s108, %s111
      %p120 = scmp.eq.s32.totalorder %s22, 1
      %p121 = por %p119, %p120
      %p122 = scmp.ne.s32.totalorder %s111, %s112
      %p123 = scmp.eq.s32.totalorder %s22, 0
      %p124 = por %p122, %p123
      %p125 = scmp.ne.s32.totalorder %s111, %s112
      %p126 = scmp.eq.s32.totalorder %s23, 1
      %p127 = por %p125, %p126
      %p129 = scmp.ne.s32.totalorder %s112, %s128
      %p130 = scmp.eq.s32.totalorder %s23, 0
      %p131 = por %p129, %p130
      %p132 = scmp.le.s32.totalorder 1, %s17
      %p133 = scmp.lt.s32.totalorder %s17, 3
      %p134 = pnand %p132, %p133
      %p135 = pneg %p134
      // Predicated region
      $region9: #{tpu_custom_call.1} parent=5 // pred_check
        _
      $region10: #{tpu_custom_call.1} parent=5 // pred_check_branch
        %137 = sbr.rel (%p134) target = $region12
      $region11: #{tpu_custom_call.1} parent=5 // pred_region
        %s138 = ssub.s32 %s17, 1
      $region12: #{tpu_custom_call.1} parent=5 // pred_fallthru
        _
      %p139 = scmp.lt.s32.totalorder %s17, 2
      // Predicated region
      $region13: #{tpu_custom_call.1} parent=5 // pred_check
        %p140 = pneg %p139
      $region14: #{tpu_custom_call.1} parent=5 // pred_check_branch
        %142 = sbr.rel (%p140) target = $region16
      $region15: #{tpu_custom_call.1} parent=5 // pred_region
        // Predicated region
        $region17: #{tpu_custom_call.1} parent=15 // pred_check
          %p143 = pneg %p60
        $region18: #{tpu_custom_call.1} parent=15 // pred_check_branch
          %145 = sbr.rel (%p143) target = $region20
        $region19: #{tpu_custom_call.1} parent=15 // pred_region
          %s146 = sand.u32 %s50, 1
          %s147 = scalar_lea.sflag [#allocation3], %s146
          %s148 = sand.u32 %s50, 1
          %s149 = smul.addr %s148, 8
          %s150 = scalar_lea.vmem [#allocation2], %s149
          %s151 = sadd.s32 %s25, %s26
          %s152 = smul.u32 2, %s151
          %s154 = ssub.s32 128, 128
          %155 = vsyncadd %s147, %s154
          %s156 = smul.addr %s24, 2
          %s157 = sadd.s32 %s152, %s156
          %s158 = smul.addr %s157, 64
          %s159 = scalar_lea.hbm %s0, %s158
          %s161 = sshll.u32 %s150, 4
          %s162 = int_to_ptr.vmem [resolvable:$true] %s161
          %164 = dma.hbm_to_vmem [thread:$0]  %s159, 128, %s162, %s147
        $region20: #{tpu_custom_call.1} parent=15 // pred_fallthru
          _
        // Predicated region
        $region21: #{tpu_custom_call.1} parent=15 // pred_check
          %p165 = pneg %p90
        $region22: #{tpu_custom_call.1} parent=15 // pred_check_branch
          %167 = sbr.rel (%p165) target = $region24
        $region23: #{tpu_custom_call.1} parent=15 // pred_region
          %s168 = sand.u32 %s80, 1
          %s169 = scalar_lea.sflag [#allocation6], %s168
          %s170 = sand.u32 %s80, 1
          %s171 = smul.addr %s170, 2
          %s172 = scalar_lea.vmem [#allocation5], %s171
          %s173 = sadd.s32 %s25, %s26
          %s174 = smul.u32 2, %s173
          %s176 = ssub.s32 32, 32
          %177 = vsyncadd %s169, %s176
          %s178 = smul.addr %s24, 2
          %s179 = sadd.s32 %s174, %s178
          %s180 = smul.addr %s179, 16
          %s181 = scalar_lea.hbm %s1, %s180
          %s183 = sshll.u32 %s172, 4
          %s184 = int_to_ptr.vmem [resolvable:$true] %s183
          %186 = dma.hbm_to_vmem [thread:$0]  %s181, 32, %s184, %s169
        $region24: #{tpu_custom_call.1} parent=15 // pred_fallthru
          _
      $region16: #{tpu_custom_call.1} parent=5 // pred_fallthru
        _
      %p187 = scmp.le.s32.totalorder 1, %s17
      %p188 = scmp.lt.s32.totalorder %s17, 3
      %p189 = pnand %p187, %p188
      %p190 = pneg %p189
      // Predicated region
      $region25: #{tpu_custom_call.1} parent=5 // pred_check
        _
      $region26: #{tpu_custom_call.1} parent=5 // pred_check_branch
        %192 = sbr.rel (%p189) target = $region28
      $region27: #{tpu_custom_call.1} parent=5 // pred_region
        %s193 = ssub.s32 %s17, 1
        %s194 = sand.u32 %s53, 1
        %s195 = scalar_lea.sflag [#allocation3], %s194
        %s196 = sand.u32 %s53, 1
        %s197 = smul.addr %s196, 8
        %s198 = scalar_lea.vmem [#allocation2], %s197
        // Predicated region
        $region29: #{tpu_custom_call.1} parent=27 // pred_check
          %p199 = pneg %p66
        $region30: #{tpu_custom_call.1} parent=27 // pred_check_branch
          %201 = sbr.rel (%p199) target = $region32
        $region31: #{tpu_custom_call.1} parent=27 // pred_region
          %202 = dma.done %s195, 128
        $region32: #{tpu_custom_call.1} parent=27 // pred_fallthru
          _
        %s203 = sand.u32 %s83, 1
        %s204 = scalar_lea.sflag [#allocation6], %s203
        %s205 = sand.u32 %s83, 1
        %s206 = smul.addr %s205, 2
        %s207 = scalar_lea.vmem [#allocation5], %s206
        // Predicated region
        $region33: #{tpu_custom_call.1} parent=27 // pred_check
          %p208 = pneg %p96
        $region34: #{tpu_custom_call.1} parent=27 // pred_check_branch
          %210 = sbr.rel (%p208) target = $region36
        $region35: #{tpu_custom_call.1} parent=27 // pred_region
          %211 = dma.done %s204, 32
        $region36: #{tpu_custom_call.1} parent=27 // pred_fallthru
          _
        %s212 = sand.u32 %s53, 1
        %s213 = scalar_lea.sflag [#allocation3], %s212
        %s214 = sand.u32 %s53, 1
        %s215 = smul.addr %s214, 8
        %s216 = scalar_lea.vmem [#allocation2], %s215
        %p217 = pneg %p66
        %p218 = pneg %p63
        %s219 = sand.u32 %s83, 1
        %s220 = scalar_lea.sflag [#allocation6], %s219
        %s221 = sand.u32 %s83, 1
        %s222 = smul.addr %s221, 2
        %s223 = scalar_lea.vmem [#allocation5], %s222
        %p224 = pneg %p96
        %p225 = pneg %p93
        %p226 = pneg %p124
        %p227 = pneg %p121
        %s228 = sand.u32 %s111, 1
        %s229 = scalar_lea.sflag [#allocation4], %s228
        %s230 = sand.u32 %s111, 1
        %s231 = smul.addr %s230, 12
        %s232 = scalar_lea.vmem [#allocation7], %s231
        %s233 = sadd.s32 %s28, %s29
        %s234 = smul.u32 2, %s233
        %s235 = sadd.s32 %s28, %s29
        %s236 = smul.u32 2, %s235
        %s237 = sadd.s32 %s27, %s28
        %p238 = scmp.eq.s32.totalorder %s29, 0
        // Predicated region
        $region37: #{tpu_custom_call.1} parent=27 // pred_check
          %p239 = pneg %p238
        $region38: #{tpu_custom_call.1} parent=27 // pred_check_branch
          %241 = sbr.rel (%p239) target = $region40
        $region39: #{tpu_custom_call.1} parent=27 // pred_region
          %242 = vst [vmem:[%s232] sm:$0xf] 0.0
          %243 = vst [vmem:[%s232 + $0x4] sm:$0xf] 0.0
          %244 = vst [vmem:[%s232 + $0x8] sm:$0xf] 0.0
        $region40: #{tpu_custom_call.1} parent=27 // pred_fallthru
          _
        %v245 = vld [vmem:[%s198] sm:$0xff]
        %v246 = vld [vmem:[%s207] sm:$0x3]
        %v247 = vlaneseq
        %v248 = vshrl.u32 %v247, 7
        %v250 = vcombine.high %v245, %v245
        %vm252 = vcmask 1043456
        %v253 = vsel %vm252, %v245, -inf
        %v254 = vrot.slane %v253, 4
        %v255 = vmax.f32 %v253, %v254
        %v256 = vrot.slane %v255, 2
        %v257 = vmax.f32 %v255, %v256
        %v258 = vrot.slane %v257, 1
        %v259 = vmax.f32 %v257, %v258
        %v260 = vsel %vm252, %v250, -inf
        %v261 = vrot.slane %v260, 4
        %v262 = vmax.f32 %v260, %v261
        %v263 = vrot.slane %v262, 2
        %v264 = vmax.f32 %v262, %v263
        %v265 = vrot.slane %v264, 1
        %v266 = vmax.f32 %v264, %v265
        %v269 = vcombine.low %v259, %v266
        %v271 = vsub.f32 %v245, %v269
        %v272 = vmul.f32 %v271, 1.442695
        %v273 = vpow.pop %v272
        %v275 = vcombine.high %v273, %v273
        %v277 = vsel %vm252, %v273, 0.0
        %v278 = vrot.slane %v277, 4
        %v279 = vadd.f32 %v277, %v278
        %v280 = vrot.slane %v279, 2
        %v281 = vadd.f32 %v279, %v280
        %v282 = vrot.slane %v281, 1
        %v283 = vadd.f32 %v281, %v282
        %v284 = vsel %vm252, %v275, 0.0
        %v285 = vrot.slane %v284, 4
        %v286 = vadd.f32 %v284, %v285
        %v287 = vrot.slane %v286, 2
        %v288 = vadd.f32 %v286, %v287
        %v289 = vrot.slane %v288, 1
        %v290 = vadd.f32 %v288, %v289
        %v291 = vrcp.pop %v283
        %v292 = vrcp.pop %v290
        %v295 = vcombine.low %v291, %v292
        %v297 = vmul.f32 %v273, %v295
        %v298 = vlaneseq
        %v299 = vshrl.u32 %v298, 7
        %v300 = vsub.s32 0, %v299
        %v301 = vrot.slane %v246, %v300
        %v302 = vlaneseq
        %v303 = vshrl.u32 %v302, 7
        %v304 = vsub.s32 1, %v303
        %v305 = vrot.slane %v246, %v304
        %vm306 = vcmp.eq.s32.totalorder %v301, %v248
        %vm307 = vcmp.eq.s32.totalorder %v305, %v248
        %v308 = vsel %vm306, 1, 0
        %v309 = vsel %vm307, 1, 0
        %v310 = vcvt.s32.f32 %v308
        %v311 = vcvt.s32.f32 %v309
        %v312 = vld [vmem:[%s232] sm:$0xf]
        %v315 = vcombine.low %v310, %v311
        %v317 = vmul.f32 %v297, %v315
        %v319 = vrot.slane %v317, 4
        %v321 = vadd.f32 %v317, %v319
        %v322 = vadd.f32 %v312, %v321
        %323 = vst [vmem:[%s232] sm:$0xf] %v322
        %s324 = scalar_lea.vmem %s232, 4 [#allocation7]
        %v325 = vld [vmem:[%s324] sm:$0xf]
        %v327 = vrot.slane %v297, 4
        %v329 = vadd.f32 %v297, %v327
        %v330 = vadd.f32 %v325, %v329
        %331 = vst [vmem:[%s324] sm:$0xf] %v330
        %s332 = scalar_lea.vmem %s232, 8 [#allocation7]
        %v333 = vld [vmem:[%s332] sm:$0xf]
        %v334 = vadd.f32 %v310, %v311
        %v335 = vadd.f32 %v333, %v334
        %336 = vst [vmem:[%s332] sm:$0xf] %v335
        %s337 = sand.u32 %s111, 1
        %s338 = scalar_lea.sflag [#allocation4], %s337
        %s339 = sand.u32 %s111, 1
        %s340 = smul.addr %s339, 12
        %s341 = scalar_lea.vmem [#allocation7], %s340
        // Predicated region
        $region41: #{tpu_custom_call.1} parent=27 // pred_check
          %p342 = pneg %p121
        $region42: #{tpu_custom_call.1} parent=27 // pred_check_branch
          %344 = sbr.rel (%p342) target = $region44
        $region43: #{tpu_custom_call.1} parent=27 // pred_region
          %s345 = sadd.s32 %s27, %s28
          %s347 = ssub.s32 192, 192
          %348 = vsyncadd %s338, %s347
          %s349 = smul.addr %s345, 3
          %s350 = smul.addr %s349, 64
          %s351 = scalar_lea.hbm %s2, %s350
          %s352 = sshll.u32 %s341, 4
          %s353 = int_to_ptr.vmem [resolvable:$true] %s352
          %358 = dma.vmem_to_hbm [thread:$0]  %s353, 192, %s351, %s338, 64, 64, 4
        $region44: #{tpu_custom_call.1} parent=27 // pred_fallthru
          _
      $region28: #{tpu_custom_call.1} parent=5 // pred_fallthru
        _
      %p359 = scmp.le.s32.totalorder 2, %s17
      // Predicated region
      $region45: #{tpu_custom_call.1} parent=5 // pred_check
        %p360 = pneg %p359
      $region46: #{tpu_custom_call.1} parent=5 // pred_check_branch
        %362 = sbr.rel (%p360) target = $region48
      $region47: #{tpu_custom_call.1} parent=5 // pred_region
        %s363 = ssub.s32 %s17, 2
        // Predicated region
        $region49: #{tpu_custom_call.1} parent=47 // pred_check
          %p364 = pneg %p127
        $region50: #{tpu_custom_call.1} parent=47 // pred_check_branch
          %366 = sbr.rel (%p364) target = $region52
        $region51: #{tpu_custom_call.1} parent=47 // pred_region
          %s367 = sand.u32 %s112, 1
          %s368 = scalar_lea.sflag [#allocation4], %s367
          %s369 = sand.u32 %s112, 1
          %s370 = smul.addr %s369, 12
          %s371 = scalar_lea.vmem [#allocation7], %s370
          %372 = dma.done %s368, 192
        $region52: #{tpu_custom_call.1} parent=47 // pred_fallthru
          _
      $region48: #{tpu_custom_call.1} parent=5 // pred_fallthru
        _
    $region6: #{tpu_custom_call.1} parent=1 // loop_footer
      %s21 = sadd.s32 1, %s17
    $region7: #{tpu_custom_call.1} parent=1 // loop_footer_branch
      %16 = sbr.rel target = $region3
    $region8: #{tpu_custom_call.1} parent=1 // loop_exit
      _
    %373 = vsyncpa [#allocation3], 1
    %s374 = scalar_lea.sflag [#allocation3], 1
    %375 = vsyncpa %s374, 1
    %376 = vsyncpa [#allocation6], 1
    %s377 = scalar_lea.sflag [#allocation6], 1
    %378 = vsyncpa %s377, 1
    %379 = vsyncpa [#allocation4], 1
    %s380 = scalar_lea.sflag [#allocation4], 1
    %381 = vsyncpa %s380, 1

</llo_original>
